<compile_context>
chip_gen: v5e
topology: v5e:2x2
jax: 0.10.0
libtpu: 0.0.40
codegen_flags: <defaults>
</compile_context>

<pallas_src>
import functools

import jax
import jax.numpy as jnp
from jax.experimental import pallas as pl
from jax.experimental.pallas import tpu as pltpu


def _round_up(x, m):
    return ((x + m - 1) // m) * m


def _patch_embed_kernel(x_ref, w_ref, b_ref, o_ref):
    """One (tm, E) output tile: full-K, full-E MXU matmul, f32 accum, bias, store."""
    o_ref[...] = (
        jnp.dot(x_ref[...], w_ref[...], preferred_element_type=jnp.float32)
        + b_ref[...]
    ).astype(o_ref.dtype)


def _choose_tm(M, K, E, bx, bw, bo):
    """Largest M tile keeping double-buffered x/out + resident weight in VMEM."""
    budget = 32 << 20                        # user-buffer budget; safe on every gen
    fixed = 2 * K * E * bw + 2 * E * 4       # resident weight + bias (worst case 2 bufs)
    per_row = 2 * (K * bx + E * bo)          # double-buffered x row + out row
    tm = max((budget - fixed) // per_row, 8)
    tm = min(tm, 2048)
    tm = (tm // 256) * 256 if tm >= 256 else max((tm // 8) * 8, 8)
    if M > 512:                              # keep >=2 M blocks so both v7x TCs get work
        tm = min(tm, _round_up(pl.cdiv(M, 2), 8))
    if M >= 8:
        tm = min(tm, (M // 8) * 8)           # don't exceed the 8-aligned problem size
    else:
        tm = M                               # tiny M: full-dim block is exempt from 8-rule
    return int(tm)


def _matmul_bias(x, w, b, out_dtype):
    """x: (M, K), w: (K, E), b: (E,) f32 -> (M, E) via one Pallas GEMM+bias pass.

    Weight/bias blocks use constant index_maps -> DMA'd to VMEM exactly once
    and held resident; the grid only walks M.
    """
    M, K = x.shape
    _, E = w.shape
    bx = jnp.dtype(x.dtype).itemsize
    bw = jnp.dtype(w.dtype).itemsize
    bo = jnp.dtype(out_dtype).itemsize

    tm = _choose_tm(M, K, E, bx, bw, bo)
    grid = (pl.cdiv(M, tm),)

    b2 = b.reshape(1, E).astype(jnp.float32)

    vmem_need = 2 * tm * K * bx + 2 * tm * E * bo + 2 * K * E * bw + 2 * E * 4
    vmem_limit = int(min(max(vmem_need + (2 << 20), 24 << 20), 48 << 20))

    cost = pl.CostEstimate(
        flops=2 * M * K * E,
        transcendentals=0,
        bytes_accessed=M * K * bx + K * E * bw + E * 4 + M * E * bo,
    )

    return pl.pallas_call(
        _patch_embed_kernel,
        out_shape=jax.ShapeDtypeStruct((M, E), out_dtype),
        grid_spec=pltpu.PrefetchScalarGridSpec(
            num_scalar_prefetch=0,
            grid=grid,
            in_specs=[
                pl.BlockSpec((tm, K), lambda i: (i, 0)),   # activation M-tile, full K
                pl.BlockSpec((K, E), lambda i: (0, 0)),    # weight: VMEM-resident
                pl.BlockSpec((1, E), lambda i: (0, 0)),    # bias:   VMEM-resident
            ],
            out_specs=pl.BlockSpec((tm, E), lambda i: (i, 0)),
        ),
        compiler_params=pltpu.CompilerParams(
            dimension_semantics=("parallel",),
            vmem_limit_bytes=vmem_limit,
        ),
        cost_estimate=cost,
    )(x, w, b2)


@functools.partial(jax.jit, static_argnames=("patch_size", "compute_dtype"))
def patch_embed_2d(x, weight, bias, *, patch_size, compute_dtype=None):
    """Forward pass of PatchEmbed2D.

    x:      (B, C, H, W)   -- NCHW, like the PyTorch module
    weight: (E, C, PH, PW) -- nn.Conv2d weight
    bias:   (E,)           -- nn.Conv2d bias
    compute_dtype: optional matmul operand dtype.  jnp.bfloat16 is recommended
        on v5e, v6e and v7x (halves activation HBM traffic; accumulation and
        bias add stay in float32).
    returns (B, num_patches, E) in x.dtype
    """
    B, C, H, W = x.shape
    PH, PW = patch_size
    E = weight.shape[0]
    nH, nW = H // PH, W // PW
    out_dtype = x.dtype

    if compute_dtype is not None:
        # Cast BEFORE the extraction copy so the transpose pass writes, and the
        # kernel re-reads, half the bytes (XLA fuses convert+transpose).
        x = x.astype(compute_dtype)
        weight = weight.astype(compute_dtype)

    # Patch extraction (layout glue): reshape+transpose+reshape fuse into one
    # XLA copy pass building the (M, K) patches matrix; contraction order is
    # (C, PH, PW) to match nn.Conv2d.
    # TODO(synk): fuse extraction into the kernel (BlockSpec over the pure
    # reshape (B, C, nH, PH, nW, PW) with in-kernel relayout, and/or
    # allow_input_fusion on the activation input) to drop this HBM pass.
    patches = x.reshape(B, C, nH, PH, nW, PW)
    patches = jnp.transpose(patches, (0, 2, 4, 1, 3, 5))
    patches = patches.reshape(B * nH * nW, C * PH * PW)

    w_mat = weight.reshape(E, C * PH * PW).T

    out = _matmul_bias(patches, w_mat, bias.astype(jnp.float32), out_dtype)
    return out.reshape(B, nH * nW, E)


def _reference(x, weight, bias, patch_size):
    """Pure-JAX reference: conv2d stride=kernel, then flatten(2).transpose(1,2)."""
    y = jax.lax.conv_general_dilated(
        x, weight,
        window_strides=patch_size,
        padding="VALID",
        dimension_numbers=("NCHW", "OIHW", "NCHW"),
    ) + bias[None, :, None, None]
    B, E, nH, nW = y.shape
    return jnp.transpose(y.reshape(B, E, nH * nW), (0, 2, 1))


def _run_case(key, B, C, H, W, PH, PW, E, compute_dtype, atol):
    kx, kw, kb = jax.random.split(key, 3)
    x = jax.random.normal(kx, (B, C, H, W), dtype=jnp.float32)
    weight = jax.random.normal(kw, (E, C, PH, PW), dtype=jnp.float32) * 0.02
    bias = jax.random.normal(kb, (E,), dtype=jnp.float32) * 0.02

    out = patch_embed_2d(x, weight, bias, patch_size=(PH, PW),
                         compute_dtype=compute_dtype)
    out = jax.block_until_ready(out)

    ref = _reference(x, weight, bias, (PH, PW))
    assert out.shape == (B, (H // PH) * (W // PW), E), out.shape
    err = float(jnp.max(jnp.abs(out - ref)))
    assert err < atol, err
    return err


if __name__ == "__main__":
    key = jax.random.PRNGKey(0)
    k1, k2, k3 = jax.random.split(key, 3)

    # 1) Module-consistent small shapes, f32 end-to-end, non-128 E (full-E block,
    #    no padding / no slicing).  img=(16,24), patch=(8,12) -> 4 patches.
    _run_case(k1, B=2, C=4, H=16, W=24, PH=8, PW=12, E=32,
              compute_dtype=None, atol=1e-4)

    # 2) Lane-aligned embed_dim + bf16 operands (fast path on all generations),
    #    f32 accumulation.
    _run_case(k2, B=2, C=3, H=64, W=96, PH=16, PW=24, E=256,
              compute_dtype=jnp.bfloat16, atol=1e-1)

    # 3) Many patches: M = 3*16*24 = 1152 -> two M blocks (tm=576), exercising
    #    the multi-block grid with the weight held VMEM-resident, and E=96
    #    (non-128-aligned, full-E output block).
    _run_case(k3, B=3, C=4, H=64, W=96, PH=4, PW=4, E=96,
              compute_dtype=None, atol=1e-4)

    print("KERNEL_OK")
</pallas_src>

<mosaic_0001>
module attributes {stable_mosaic.version = 11 : i64} {
  func.func @_patch_embed_kernel(%arg0: i32, %arg1: memref<8x384xf32, #tpu.memory_space<vmem>>, %arg2: memref<384x32xf32, #tpu.memory_space<vmem>>, %arg3: memref<1x32xf32, #tpu.memory_space<vmem>>, %arg4: memref<8x32xf32, #tpu.memory_space<vmem>>) attributes {dimension_semantics = [#tpu.dimension_semantics<parallel>], iteration_bounds = array<i64: 1>, scalar_prefetch = 0 : i64, scratch_operands = 0 : i64, tpu.core_type = #tpu.core_type<tc>, window_params = [{transform_indices = @transform_0, window_bounds = array<i64: 8, 384>}, {pipeline_mode = #tpu.pipeline_mode<synchronous>, transform_indices = @transform_1, window_bounds = array<i64: 384, 32>}, {pipeline_mode = #tpu.pipeline_mode<synchronous>, transform_indices = @transform_2, window_bounds = array<i64: 1, 32>}, {transform_indices = @transform_3, window_bounds = array<i64: 8, 32>}]} {
    %c0 = arith.constant 0 : index
    %c0_0 = arith.constant 0 : index
    %0 = vector.load %arg1[%c0, %c0_0] : memref<8x384xf32, #tpu.memory_space<vmem>>, vector<8x384xf32>
    %c0_1 = arith.constant 0 : index
    %c0_2 = arith.constant 0 : index
    %1 = vector.load %arg2[%c0_1, %c0_2] : memref<384x32xf32, #tpu.memory_space<vmem>>, vector<384x32xf32>
    %cst = arith.constant dense<0.000000e+00> : vector<8x32xf32>
    %2 = tpu.matmul %0, %1, %cst {dimension_numbers = #tpu.dot_dimension_numbers<[1], [0], [0], [1], [0, 0, 1, 1], [], []>} : vector<8x384xf32>, vector<384x32xf32>, vector<8x32xf32> -> vector<8x32xf32>
    %c0_3 = arith.constant 0 : index
    %c0_4 = arith.constant 0 : index
    %3 = vector.load %arg3[%c0_3, %c0_4] : memref<1x32xf32, #tpu.memory_space<vmem>>, vector<1x32xf32>
    %4 = vector.broadcast %3 : vector<1x32xf32> to vector<8x32xf32>
    %5 = arith.addf %2, %4 : vector<8x32xf32>
    %c0_5 = arith.constant 0 : index
    %c0_6 = arith.constant 0 : index
    %6 = vector.load %arg4[%c0_5, %c0_6] : memref<8x32xf32, #tpu.memory_space<vmem>>, vector<8x32xf32>
    tpu.vector_store %arg4[%c0_5, %c0_6], %5 {strides = array<i32>} : memref<8x32xf32, #tpu.memory_space<vmem>>, vector<8x32xf32>,
    return
  }
  func.func @transform_0(%arg0: i32) -> (i32, i32) {
    %c0_i32 = arith.constant 0 : i32
    %c0_i32_0 = arith.constant 0 : i32
    return %arg0, %c0_i32 : i32, i32
  }
  func.func @transform_1(%arg0: i32) -> (i32, i32) {
    %c0_i32 = arith.constant 0 : i32
    %c0_i32_0 = arith.constant 0 : i32
    %c0_i32_1 = arith.constant 0 : i32
    return %c0_i32, %c0_i32_0 : i32, i32
  }
  func.func @transform_2(%arg0: i32) -> (i32, i32) {
    %c0_i32 = arith.constant 0 : i32
    %c0_i32_0 = arith.constant 0 : i32
    %c0_i32_1 = arith.constant 0 : i32
    return %c0_i32, %c0_i32_0 : i32, i32
  }
  func.func @transform_3(%arg0: i32) -> (i32, i32) {
    %c0_i32 = arith.constant 0 : i32
    %c0_i32_0 = arith.constant 0 : i32
    return %arg0, %c0_i32 : i32, i32
  }
}

</mosaic_0001>

<llo_original>
// kernel: patch_embed_2d.1
$region0: #{patch_embed_2d.1}
  #allocation0 [shape = 'u32[]', space=smem, size = 0x4, offset = 0x4, fixed_abs, tag = 'smem constant byte address 0x4 - core index']
  #allocation1 [shape = 'u32[72,128]{1,0:T(1,128)}', space=vmem, size = 0x9000, scoped, tag = 'internal scratch']
  %s0 = inlined_call_operand.vmem [shape: f32[8,384], index: 0, kind: input, shape index: {}]
  %s1 = inlined_call_operand.vmem [shape: f32[384,32], index: 1, kind: input, shape index: {}]
  %s2 = inlined_call_operand.vmem [shape: f32[1,32], index: 2, kind: input, shape index: {}]
  %s3 = inlined_call_operand.hbm [shape: f32[8,32], index: 3, kind: output, shape index: {}]
  %s4 = sld [smem:[#allocation0]]
  $region22: #{patch_embed_2d.1} parent=0
    _
  %s6 = ssub.s32 1, %s4
  %s7 = scalar_select 0, %s6, %s4
  $region1: #{patch_embed_2d.1} parent=0
    #allocation2 [shape = 'u8[4096]{0}', space=vmem, size = 0x1000, scoped, tag = 'output window, operand 0, single buffered']
    #allocation3 [shape = 's32[1]{0}', space=sflag, size = 0x4, scoped, tag = 'scoped memory for patch_embed_2d.1']
    %8 = vsyncpa [#allocation3], 0
    // Predicated region
    $region2: #{patch_embed_2d.1} parent=1 // pred_check
      _
    $region3: #{patch_embed_2d.1} parent=1 // pred_check_branch
      %10 = sbr.rel (0) target = $region5
    $region4: #{patch_embed_2d.1} parent=1 // pred_region
      _
    $region5: #{patch_embed_2d.1} parent=1 // pred_fallthru
      _
    // Predicated region
    $region6: #{patch_embed_2d.1} parent=1 // pred_check
      _
    $region7: #{patch_embed_2d.1} parent=1 // pred_check_branch
      %12 = sbr.rel (0) target = $region9
    $region8: #{patch_embed_2d.1} parent=1 // pred_region
      _
    $region9: #{patch_embed_2d.1} parent=1 // pred_fallthru
      _
    // Predicated region
    $region10: #{patch_embed_2d.1} parent=1 // pred_check
      _
    $region11: #{patch_embed_2d.1} parent=1 // pred_check_branch
      %14 = sbr.rel (0) target = $region13
    $region12: #{patch_embed_2d.1} parent=1 // pred_region
      _
    $region13: #{patch_embed_2d.1} parent=1 // pred_fallthru
      _
    %v15 = vld [vmem:[%s0] sm:$0xff]
    %v16 = vld [vmem:[%s0 + $0x8] sm:$0xff]
    %v17 = vld [vmem:[%s0 + $0x10] sm:$0xff]
    %v18 = vld [vmem:[%s1] sm:$0xff]
    %v19 = vld [vmem:[%s1 + $0x8] sm:$0xff]
    %v20 = vld [vmem:[%s1 + $0x10] sm:$0xff]
    %v21 = vld [vmem:[%s1 + $0x18] sm:$0xff]
    %v22 = vld [vmem:[%s1 + $0x20] sm:$0xff]
    %v23 = vld [vmem:[%s1 + $0x28] sm:$0xff]
    %v24 = vld [vmem:[%s1 + $0x30] sm:$0xff]
    %v25 = vld [vmem:[%s1 + $0x38] sm:$0xff]
    %v26 = vld [vmem:[%s1 + $0x40] sm:$0xff]
    %v27 = vld [vmem:[%s1 + $0x48] sm:$0xff]
    %v28 = vld [vmem:[%s1 + $0x50] sm:$0xff]
    %v29 = vld [vmem:[%s1 + $0x58] sm:$0xff]
    %v30 = vld [vmem:[%s1 + $0x60] sm:$0xff]
    %v31 = vld [vmem:[%s1 + $0x68] sm:$0xff]
    %v32 = vld [vmem:[%s1 + $0x70] sm:$0xff]
    %v33 = vld [vmem:[%s1 + $0x78] sm:$0xff]
    %v34 = vld [vmem:[%s1 + $0x80] sm:$0xff]
    %v35 = vld [vmem:[%s1 + $0x88] sm:$0xff]
    %v36 = vld [vmem:[%s1 + $0x90] sm:$0xff]
    %v37 = vld [vmem:[%s1 + $0x98] sm:$0xff]
    %v38 = vld [vmem:[%s1 + $0xa0] sm:$0xff]
    %v39 = vld [vmem:[%s1 + $0xa8] sm:$0xff]
    %v40 = vld [vmem:[%s1 + $0xb0] sm:$0xff]
    %v41 = vld [vmem:[%s1 + $0xb8] sm:$0xff]
    %v42 = vld [vmem:[%s1 + $0xc0] sm:$0xff]
    %v43 = vld [vmem:[%s1 + $0xc8] sm:$0xff]
    %v44 = vld [vmem:[%s1 + $0xd0] sm:$0xff]
    %v45 = vld [vmem:[%s1 + $0xd8] sm:$0xff]
    %v46 = vld [vmem:[%s1 + $0xe0] sm:$0xff]
    %v47 = vld [vmem:[%s1 + $0xe8] sm:$0xff]
    %v48 = vld [vmem:[%s1 + $0xf0] sm:$0xff]
    %v49 = vld [vmem:[%s1 + $0xf8] sm:$0xff]
    %v50 = vld [vmem:[%s1 + $0x100] sm:$0xff]
    %v51 = vld [vmem:[%s1 + $0x108] sm:$0xff]
    %v52 = vld [vmem:[%s1 + $0x110] sm:$0xff]
    %v53 = vld [vmem:[%s1 + $0x118] sm:$0xff]
    %v54 = vld [vmem:[%s1 + $0x120] sm:$0xff]
    %v55 = vld [vmem:[%s1 + $0x128] sm:$0xff]
    %v56 = vld [vmem:[%s1 + $0x130] sm:$0xff]
    %v57 = vld [vmem:[%s1 + $0x138] sm:$0xff]
    %v58 = vld [vmem:[%s1 + $0x140] sm:$0xff]
    %v59 = vld [vmem:[%s1 + $0x148] sm:$0xff]
    %v60 = vld [vmem:[%s1 + $0x150] sm:$0xff]
    %v61 = vld [vmem:[%s1 + $0x158] sm:$0xff]
    %v62 = vld [vmem:[%s1 + $0x160] sm:$0xff]
    %v63 = vld [vmem:[%s1 + $0x168] sm:$0xff]
    %v64 = vld [vmem:[%s1 + $0x170] sm:$0xff]
    %v65 = vld [vmem:[%s1 + $0x178] sm:$0xff]
    %v66 = vld [vmem:[%s2] sm:$0x1]
    %v68 = vperm.slane %v66, 0
    %70 = vmatpush.msra.mxu0 %v33
    %71 = vmatpush.msra.mxu0 %v32
    %72 = vmatpush.msra.mxu0 %v31
    %73 = vmatpush.msra.mxu0 %v30
    %74 = vmatpush.msra.mxu0 %v29
    %75 = vmatpush.msra.mxu0 %v28
    %76 = vmatpush.msra.mxu0 %v27
    %77 = vmatpush.msra.mxu0 %v26
    %78 = vmatpush.msra.mxu0 %v25
    %79 = vmatpush.msra.mxu0 %v24
    %80 = vmatpush.msra.mxu0 %v23
    %81 = vmatpush.msra.mxu0 %v22
    %82 = vmatpush.msra.mxu0 %v21
    %83 = vmatpush.msra.mxu0 %v20
    %84 = vmatpush.msra.mxu0 %v19
    %85 = vmatpush.msra.mxu0 %v18
    %86 = vmatmul.f32.gmra.mxu0 %v15
    %v87 = vpop.f32.mrf.mxu0
    %v88 = vadd.f32 %v68, %v87
    %89 = vdwg.mxu0
    %90 = vmatpush.msra.mxu0 %v49
    %91 = vmatpush.msra.mxu0 %v48
    %92 = vmatpush.msra.mxu0 %v47
    %93 = vmatpush.msra.mxu0 %v46
    %94 = vmatpush.msra.mxu0 %v45
    %95 = vmatpush.msra.mxu0 %v44
    %96 = vmatpush.msra.mxu0 %v43
    %97 = vmatpush.msra.mxu0 %v42
    %98 = vmatpush.msra.mxu0 %v41
    %99 = vmatpush.msra.mxu0 %v40
    %100 = vmatpush.msra.mxu0 %v39
    %101 = vmatpush.msra.mxu0 %v38
    %102 = vmatpush.msra.mxu0 %v37
    %103 = vmatpush.msra.mxu0 %v36
    %104 = vmatpush.msra.mxu0 %v35
    %105 = vmatpush.msra.mxu0 %v34
    %106 = vmatmul.f32.gmra.mxu0 %v16
    %v107 = vpop.f32.mrf.mxu0
    %v108 = vadd.f32 %v88, %v107
    %109 = vdwg.mxu0
    %110 = vmatpush.msra.mxu0 %v65
    %111 = vmatpush.msra.mxu0 %v64
    %112 = vmatpush.msra.mxu0 %v63
    %113 = vmatpush.msra.mxu0 %v62
    %114 = vmatpush.msra.mxu0 %v61
    %115 = vmatpush.msra.mxu0 %v60
    %116 = vmatpush.msra.mxu0 %v59
    %117 = vmatpush.msra.mxu0 %v58
    %118 = vmatpush.msra.mxu0 %v57
    %119 = vmatpush.msra.mxu0 %v56
    %120 = vmatpush.msra.mxu0 %v55
    %121 = vmatpush.msra.mxu0 %v54
    %122 = vmatpush.msra.mxu0 %v53
    %123 = vmatpush.msra.mxu0 %v52
    %124 = vmatpush.msra.mxu0 %v51
    %125 = vmatpush.msra.mxu0 %v50
    %126 = vmatmul.f32.gmra.mxu0 %v17
    %v127 = vpop.f32.mrf.mxu0
    %v128 = vadd.f32 %v108, %v127
    %129 = vdwg.mxu0
    %vm130 = vcmask 261120
    %131 = vst.msk [vmem:[#allocation2] sm:$0xff] %vm130, %v128
    // Predicated region
    $region14: #{patch_embed_2d.1} parent=1 // pred_check
      _
    $region15: #{patch_embed_2d.1} parent=1 // pred_check_branch
      %133 = sbr.rel (0) target = $region17
    $region16: #{patch_embed_2d.1} parent=1 // pred_region
      %135 = vsyncadd [#allocation3], 0
      %s137 = sshll.u32 [#allocation2], 4
      %s138 = int_to_ptr.vmem [resolvable:$true] %s137
      %s139 = sshll.u32 %s3, 4
      %s140 = int_to_ptr.hbm [resolvable:$true] %s139
      %142 = dma.vmem_to_hbm [thread:$0]  %s138, 128, %s140, [#allocation3]
    $region17: #{patch_embed_2d.1} parent=1 // pred_fallthru
      _
    // Predicated region
    $region18: #{patch_embed_2d.1} parent=1 // pred_check
      _
    $region19: #{patch_embed_2d.1} parent=1 // pred_check_branch
      %144 = sbr.rel (0) target = $region21
    $region20: #{patch_embed_2d.1} parent=1 // pred_region
      %146 = dma.done [#allocation3], 128
    $region21: #{patch_embed_2d.1} parent=1 // pred_fallthru
      _
    %147 = vsyncpa [#allocation3], 1

</llo_original>
